<compile_context>
chip_gen: v7x
topology: tpu7x:2x2x1
jax: 0.10.0
libtpu: 0.0.40
codegen_flags: <defaults>
</compile_context>

<pallas_src>
import jax
import jax.numpy as jnp
from jax.experimental import pallas as pl
from jax.experimental.pallas import tpu as pltpu

_MAX_DMA_CHUNKS = 4            # concurrent HBM->HBM DMA streams for big arrays
_CHUNK_MIN_BYTES = 4 << 20     # below this, one whole-array DMA is plenty


def _chunk_bounds(dim0, max_chunks=_MAX_DMA_CHUNKS):
    """Static (start, size) splits of the leading dim into <= max_chunks pieces."""
    n = max(1, min(max_chunks, dim0))
    base, rem = divmod(dim0, n)
    bounds = []
    start = 0
    for i in range(n):
        size = base + (1 if i < rem else 0)
        if size == 0:
            continue
        bounds.append((start, size))
        start += size
    return tuple(bounds)


def _make_hbm_copy_kernel(chunks):
    """Build a kernel that DMAs x (HBM) -> o (HBM) directly, no VMEM staging.

    `chunks` is either None (single whole-array copy) or a tuple of static
    (start, size) windows along the leading axis, issued concurrently.
    """
    def kernel(x_hbm, o_hbm, sems):
        if chunks is None:
            cp = pltpu.make_async_copy(x_hbm, o_hbm, sems.at[0])
            cp.start()
            cp.wait()
            return
        copies = []
        for i, (start, size) in enumerate(chunks):
            cp = pltpu.make_async_copy(
                x_hbm.at[pl.ds(start, size)],
                o_hbm.at[pl.ds(start, size)],
                sems.at[i],
            )
            cp.start()          # issue all DMAs back-to-back (overlapped)
            copies.append(cp)
        for cp in copies:       # then drain
            cp.wait()
    return kernel


def _identity_copy(x):
    """Identity feature pass: direct HBM->HBM DMA copy of x."""
    total_bytes = x.size * x.dtype.itemsize
    if x.ndim == 0 or x.shape[0] < 2 or total_bytes < _CHUNK_MIN_BYTES:
        chunks = None
        n_sems = 1
    else:
        chunks = _chunk_bounds(x.shape[0])
        n_sems = len(chunks)

    return pl.pallas_call(
        _make_hbm_copy_kernel(chunks),
        out_shape=jax.ShapeDtypeStruct(x.shape, x.dtype),
        in_specs=[pl.BlockSpec(memory_space=pl.ANY)],   # raw HBM ref, no auto-DMA
        out_specs=pl.BlockSpec(memory_space=pl.ANY),    # raw HBM ref, no auto-DMA
        scratch_shapes=[pltpu.SemaphoreType.DMA((n_sems,))],
    )(x)


# jit the whole forward so there is a single dispatch per call; the chunking
# logic above is static (shape-dependent) and folds away at trace time.
_identity_copy_jit = jax.jit(_identity_copy)


class FeaturesPallas:
    """JAX/Pallas analogue of the SiamMask `Features` base module."""

    def __init__(self):
        # Mirrors the PyTorch module: no parameters, unknown feature size.
        self.feature_size = -1

    def __call__(self, x):
        return self.forward(x)

    def forward(self, x):
        # TODO(synk): PyTorch Features.forward raises NotImplementedError; this
        #             identity pass-through is the runnable stand-in.
        return _identity_copy_jit(x)

    # Parity helper with the PyTorch API (no-op here: no parameters).
    def param_groups(self, start_lr, feature_mult=1):
        return [{'params': [], 'lr': start_lr * feature_mult}]


if __name__ == "__main__":
    key = jax.random.PRNGKey(0)
    # Small NCHW input consistent with a feature-extractor forward pass.
    x = jax.random.normal(key, (2, 4, 16, 16), dtype=jnp.float32)

    model = FeaturesPallas()
    y = model(x)
    y = jax.block_until_ready(y)

    assert y.shape == x.shape and y.dtype == x.dtype
    assert bool(jnp.allclose(y, x))
    print("KERNEL_OK")
</pallas_src>

<mosaic_0001>
module attributes {stable_mosaic.version = 11 : i64} {
  func.func @kernel(%arg0: memref<2x4x16x16xf32, #tpu.memory_space<any>>, %arg1: memref<2x4x16x16xf32, #tpu.memory_space<any>>, %arg2: memref<1x!tpu.dma_semaphore, #tpu.memory_space<semaphore_mem>>) attributes {dimension_semantics = [], scalar_prefetch = 0 : i64, scratch_operands = 1 : i64, tpu.core_type = #tpu.core_type<tc>} {
    %c0_i32 = arith.constant 0 : i32
    %0 = tpu.memref_slice %arg2[%c0_i32] : memref<1x!tpu.dma_semaphore, #tpu.memory_space<semaphore_mem>> -> memref<1x!tpu.dma_semaphore, #tpu.memory_space<semaphore_mem>>
    %1 = tpu.memref_squeeze %0 : memref<1x!tpu.dma_semaphore, #tpu.memory_space<semaphore_mem>> -> memref<!tpu.dma_semaphore, #tpu.memory_space<semaphore_mem>>
    tpu.enqueue_dma source(%arg0 : memref<2x4x16x16xf32, #tpu.memory_space<any>>) target(%arg1 : memref<2x4x16x16xf32, #tpu.memory_space<any>>) target_semaphore(%1 : memref<!tpu.dma_semaphore, #tpu.memory_space<semaphore_mem>>)
    %c0_i32_0 = arith.constant 0 : i32
    %2 = tpu.memref_slice %arg2[%c0_i32_0] : memref<1x!tpu.dma_semaphore, #tpu.memory_space<semaphore_mem>> -> memref<1x!tpu.dma_semaphore, #tpu.memory_space<semaphore_mem>>
    %3 = tpu.memref_squeeze %2 : memref<1x!tpu.dma_semaphore, #tpu.memory_space<semaphore_mem>> -> memref<!tpu.dma_semaphore, #tpu.memory_space<semaphore_mem>>
    tpu.wait_dma2 semaphore(%3 : memref<!tpu.dma_semaphore, #tpu.memory_space<semaphore_mem>>) src(%arg0 : memref<2x4x16x16xf32, #tpu.memory_space<any>>) dst(%arg1 : memref<2x4x16x16xf32, #tpu.memory_space<any>>)
    return
  }
}

</mosaic_0001>

<llo_original>
// kernel: _identity_copy.1
$region0: #{_identity_copy.1}
  #allocation0 [shape = 'u32[]', space=smem, size = 0x4, offset = 0x4, fixed_abs, tag = 'smem constant byte address 0x4 - core index']
  #allocation1 [shape = 'u32[144,128]{1,0:T(1,128)}', space=vmem, size = 0x12000, scoped, tag = 'internal scratch']
  #allocation2 [shape = 's32[1]{0}', space=sflag, size = 0x4, scoped, tag = 'scratch operand']
  #allocation3 [shape = 's32[]', space=sflag, size = 0x4, offset = 0, fixed_abs, tag = 'sflag constant byte address 0x0 - dummy sync flag']
  #allocation4 [shape = 'u32[0]{0}', space=smem, size = 0, offset = 0, fixed_abs, tag = 'smem constant byte address 0x0 - null']
  %s0 = inlined_call_operand.hbm [shape: f32[2,4,16,16], index: 0, kind: input, shape index: {}]
  %s1 = inlined_call_operand.hbm [shape: f32[2,4,16,16], index: 1, kind: output, shape index: {}]
  %s2 = sld [smem:[#allocation0]]
  $region2: #{_identity_copy.1} parent=0
    _
  %s4 = ssub.s32 1, %s2
  %s5 = scalar_select 0, %s4, %s2
  %s7 = sshll.u32 1, 14
  %s8 = sxor.u32 4294967295, %s7
  %s11 = sshll.u32 3, 24
  %s12 = sxor.u32 4294967295, %s11
  %s13 = sand.u32 0, %s12
  %s15 = sor.u32 %s13, 0
  %18 = dma.general %s0, 2048, %s1, [#allocation2], [#allocation3], [#allocation4], %s15, 0
  %s19 = smul.u32 2, 4
  %s20 = smul.u32 %s19, 16
  %s21 = smul.u32 %s20, 1
  %s22 = sshll.u32 %s21, 4
  %23 = dma.done [#allocation2], %s22
  %24 = vsyncmov [#allocation2]
  %s25 = vpop.sfrf %24
  %p26 = scmp.eq.s32.totalorder %s25, 0
  %p27 = pneg %p26
  %29 = shalt.err (%p27)

</llo_original>
